<compile_context>
chip_gen: v6e
topology: v6e:2x2x1
jax: 0.10.0
libtpu: 0.0.40
codegen_flags: <defaults>
</compile_context>

<pallas_src>
import functools
import numpy as np
import jax
import jax.numpy as jnp
from jax.experimental import pallas as pl
from jax.experimental.pallas import tpu as pltpu


# ----------------------------------------------------------------------------
# small helpers
# ----------------------------------------------------------------------------
def _round_up(n, m):
    return (n + m - 1) // m * m


def _cdiv(a, b):
    return -(-a // b)


def _row_tile(n, cap):
    """Row tile: biggest multiple of 8 <= cap, split so grid has >=2 steps."""
    t = min(cap, _round_up(max(n, 1), 8))
    if n > 8 and _cdiv(n, t) < 2:          # keep both v7x TensorCores busy
        t = _round_up(_cdiv(n, 2), 8)
    return t


def _default_vmem_limit():
    try:
        kind = jax.devices()[0].device_kind.lower()
    except Exception:
        kind = ""
    if "v5" in kind or "v6" in kind:       # 128 MiB physical VMEM
        return 100 * 1024 * 1024
    return 48 * 1024 * 1024                # v7x (64 MiB) and safe default


_VMEM_LIMIT = _default_vmem_limit()
_CP1 = pltpu.CompilerParams(dimension_semantics=("parallel",),
                            vmem_limit_bytes=_VMEM_LIMIT)


def _gelu(x):
    return 0.5 * x * (1.0 + jnp.tanh(0.7978845608028654 *
                                     (x + 0.044715 * x * x * x)))


def _act(x, act):
    if act == "gelu":
        return _gelu(x)
    if act == "sigmoid":
        return 1.0 / (1.0 + jnp.exp(-x))
    return x


# ----------------------------------------------------------------------------
# Pallas kernels
# ----------------------------------------------------------------------------
def _linear_kernel(x_ref, w_ref, b_ref, o_ref, *, act):
    acc = jnp.dot(x_ref[...].astype(jnp.bfloat16), w_ref[...],
                  preferred_element_type=jnp.float32) + b_ref[...]
    o_ref[...] = _act(acc, act)


def pallas_linear(x, w, b=None, act="none", tile=512):
    """y = act(x @ w + b), tiled over rows; x cast to bf16 on the VPU."""
    n, k = x.shape
    o = w.shape[1]
    if b is None:
        b = jnp.zeros((o,), jnp.float32)
    t = _row_tile(n, tile)
    nt = _cdiv(n, t)
    return pl.pallas_call(
        functools.partial(_linear_kernel, act=act),
        grid=(nt,),
        in_specs=[pl.BlockSpec((t, k), lambda i: (i, 0)),
                  pl.BlockSpec((k, o), lambda i: (0, 0)),
                  pl.BlockSpec((1, o), lambda i: (0, 0))],
        out_specs=pl.BlockSpec((t, o), lambda i: (i, 0)),
        out_shape=jax.ShapeDtypeStruct((n, o), jnp.float32),
        compiler_params=_CP1,
    )(x, w.astype(jnp.bfloat16), b.reshape(1, o).astype(jnp.float32))


def linear(x, w, b=None, act="none"):
    """Dispatcher: tiny matmuls (MXU-useless) go to plain XLA."""
    n, k = x.shape
    o = w.shape[1]
    if n < 16 or k < 16 or o < 16:
        y = jnp.dot(x.astype(jnp.float32), w.astype(jnp.float32))
        if b is not None:
            y = y + b.astype(jnp.float32)
        return _act(y, act)
    return pallas_linear(x, w, b, act)


def _ln_kernel(x_ref, g_ref, b_ref, o_ref, *, eps):
    x = x_ref[...].astype(jnp.float32)
    mu = jnp.mean(x, axis=-1, keepdims=True)
    xc = x - mu
    var = jnp.mean(xc * xc, axis=-1, keepdims=True)
    y = xc * jax.lax.rsqrt(var + eps) * g_ref[...] + b_ref[...]
    o_ref[...] = y.astype(o_ref.dtype)


def pallas_layernorm(x, g, b, eps=1e-6, out_dtype=jnp.float32):
    n, c = x.shape
    t = _row_tile(n, 512)
    nt = _cdiv(n, t)
    return pl.pallas_call(
        functools.partial(_ln_kernel, eps=eps),
        grid=(nt,),
        in_specs=[pl.BlockSpec((t, c), lambda i: (i, 0)),
                  pl.BlockSpec((1, c), lambda i: (0, 0)),
                  pl.BlockSpec((1, c), lambda i: (0, 0))],
        out_specs=pl.BlockSpec((t, c), lambda i: (i, 0)),
        out_shape=jax.ShapeDtypeStruct((n, c), out_dtype),
        compiler_params=_CP1,
    )(x, g.reshape(1, c).astype(jnp.float32), b.reshape(1, c).astype(jnp.float32))


def _ffn_kernel(x_ref, w1_ref, b1_ref, w2_ref, b2_ref, g_ref, b_ref, o_ref, *, eps):
    x = x_ref[...]
    h = jnp.dot(x.astype(jnp.bfloat16), w1_ref[...],
                preferred_element_type=jnp.float32) + b1_ref[...]
    h = _gelu(h)
    f = jnp.dot(h.astype(jnp.bfloat16), w2_ref[...],
                preferred_element_type=jnp.float32) + b2_ref[...]
    y = x + f
    mu = jnp.mean(y, axis=-1, keepdims=True)
    yc = y - mu
    var = jnp.mean(yc * yc, axis=-1, keepdims=True)
    o_ref[...] = yc * jax.lax.rsqrt(var + eps) * g_ref[...] + b_ref[...]


def pallas_ffn_block(x, w1, b1, w2, b2, g, b, eps=1e-6):
    """out = LN(x + W2 @ GELU(W1 @ x)) fused per row tile (post-norm FFN)."""
    n, d = x.shape
    dh = w1.shape[1]
    t = _row_tile(n, 256)
    nt = _cdiv(n, t)
    return pl.pallas_call(
        functools.partial(_ffn_kernel, eps=eps),
        grid=(nt,),
        in_specs=[pl.BlockSpec((t, d), lambda i: (i, 0)),
                  pl.BlockSpec((d, dh), lambda i: (0, 0)),
                  pl.BlockSpec((1, dh), lambda i: (0, 0)),
                  pl.BlockSpec((dh, d), lambda i: (0, 0)),
                  pl.BlockSpec((1, d), lambda i: (0, 0)),
                  pl.BlockSpec((1, d), lambda i: (0, 0)),
                  pl.BlockSpec((1, d), lambda i: (0, 0))],
        out_specs=pl.BlockSpec((t, d), lambda i: (i, 0)),
        out_shape=jax.ShapeDtypeStruct((n, d), jnp.float32),
        compiler_params=_CP1,
    )(x, w1, b1.reshape(1, dh), w2, b2.reshape(1, d),
      g.reshape(1, d), b.reshape(1, d))


def _attn_layer_kernel(x_ref, cwq_ref, cwk_ref, pad_ref, wqkv_ref, bqkv_ref,
                       wo_ref, bo_ref, g_ref, b_ref, o_ref,
                       *, nheads, ns, scale, eps):
    """Fused per-batch-element attention layer:
       per-head QKV proj -> in-kernel relpos bias + padding mask -> softmax
       -> per-head output proj (accumulated) -> residual -> LayerNorm."""
    xb = x_ref[0]                                              # (Sp, d) f32
    sp, d = xb.shape
    xb16 = xb.astype(jnp.bfloat16)
    rows = jax.lax.broadcasted_iota(jnp.int32, (sp, sp), 0)
    cols = jax.lax.broadcasted_iota(jnp.int32, (sp, sp), 1)
    keep = jnp.where((rows >= ns) & (cols >= ns), 1.0, 0.0)    # rel-pos only
    padb = pad_ref[0]                                          # (1, Sp) additive
    proj = jnp.zeros((sp, d), jnp.float32)
    for h in range(nheads):
        q = jnp.dot(xb16, wqkv_ref[0, h],
                    preferred_element_type=jnp.float32) + bqkv_ref[0, h:h + 1]
        k = jnp.dot(xb16, wqkv_ref[1, h],
                    preferred_element_type=jnp.float32) + bqkv_ref[1, h:h + 1]
        v = jnp.dot(xb16, wqkv_ref[2, h],
                    preferred_element_type=jnp.float32) + bqkv_ref[2, h:h + 1]
        rb = (cwq_ref[0, h] - cwk_ref[0, h]) * keep            # (Sp, Sp)
        s = jnp.einsum("qd,kd->qk", q.astype(jnp.bfloat16), k.astype(jnp.bfloat16),
                       preferred_element_type=jnp.float32)
        s = s * scale + rb + padb
        m = jnp.max(s, axis=-1, keepdims=True)
        p = jnp.exp(s - m)
        l = jnp.sum(p, axis=-1, keepdims=True)
        p = p / l                                              # exact softmax
        oh = jnp.dot(p.astype(jnp.bfloat16), v.astype(jnp.bfloat16),
                     preferred_element_type=jnp.float32)
        proj = proj + jnp.dot(oh.astype(jnp.bfloat16), wo_ref[h],
                              preferred_element_type=jnp.float32)
    y = xb + proj + bo_ref[...]
    mu = jnp.mean(y, axis=-1, keepdims=True)
    yc = y - mu
    var = jnp.mean(yc * yc, axis=-1, keepdims=True)
    o_ref[0] = yc * jax.lax.rsqrt(var + eps) * g_ref[...] + b_ref[...]


def fused_attention_layer(x, cwq, cwk, pad_add, lp, ns, eps=1e-6):
    B, Sp, d = x.shape
    H = lp["wqkv_h"].shape[1]
    dh = lp["wqkv_h"].shape[3]
    scale = 1.0 / float(np.sqrt(dh))
    return pl.pallas_call(
        functools.partial(_attn_layer_kernel, nheads=H, ns=ns, scale=scale, eps=eps),
        grid=(B,),
        in_specs=[pl.BlockSpec((1, Sp, d), lambda b: (b, 0, 0)),
                  pl.BlockSpec((1, H, Sp, 1), lambda b: (b, 0, 0, 0)),
                  pl.BlockSpec((1, H, 1, Sp), lambda b: (b, 0, 0, 0)),
                  pl.BlockSpec((1, 1, Sp), lambda b: (b, 0, 0)),
                  pl.BlockSpec((3, H, d, dh), lambda b: (0, 0, 0, 0)),
                  pl.BlockSpec((3, H, dh), lambda b: (0, 0, 0)),
                  pl.BlockSpec((H, dh, d), lambda b: (0, 0, 0)),
                  pl.BlockSpec((1, d), lambda b: (0, 0)),
                  pl.BlockSpec((1, d), lambda b: (0, 0)),
                  pl.BlockSpec((1, d), lambda b: (0, 0))],
        out_specs=pl.BlockSpec((1, Sp, d), lambda b: (b, 0, 0)),
        out_shape=jax.ShapeDtypeStruct((B, Sp, d), jnp.float32),
        compiler_params=_CP1,
    )(x, cwq, cwk, pad_add, lp["wqkv_h"], lp["bqkv_h"], lp["wo_h"],
      lp["bo"].reshape(1, d), lp["ln1_g"].reshape(1, d), lp["ln1_b"].reshape(1, d))


def _block_front_kernel(g_ref, dww_ref, dwb_ref, lng_ref, lnb_ref, w1_ref, b1_ref,
                        h_ref, ss_ref, *, n_rows, tile, eps):
    """dwconv(27 taps, tap-major) -> LN -> pw1 -> GELU (+ GRN partial sums)."""
    c = g_ref.shape[2]
    acc = jnp.zeros((tile, c), jnp.float32)
    for kk in range(27):
        acc = acc + g_ref[kk].astype(jnp.float32) * dww_ref[kk:kk + 1, :]
    acc = acc + dwb_ref[...]
    mu = jnp.mean(acc, axis=-1, keepdims=True)
    xc = acc - mu
    var = jnp.mean(xc * xc, axis=-1, keepdims=True)
    xn = xc * jax.lax.rsqrt(var + eps) * lng_ref[...] + lnb_ref[...]
    h = jnp.dot(xn.astype(jnp.bfloat16), w1_ref[...],
                preferred_element_type=jnp.float32) + b1_ref[...]
    h = _gelu(h)
    # per-tile GRN column sum-of-squares (mask rows beyond the real N)
    rows = pl.program_id(0) * tile + jax.lax.broadcasted_iota(jnp.int32, (tile, 1), 0)
    hm = jnp.where(rows < n_rows, h, 0.0)
    ss = jnp.sum(hm * hm, axis=0, keepdims=True)
    ss_ref[...] = jnp.broadcast_to(ss.reshape(1, 1, -1), ss_ref.shape)
    h_ref[...] = h.astype(jnp.bfloat16)


def _block_back_kernel(h_ref, nx_ref, gg_ref, gb_ref, w2_ref, b2_ref, res_ref, o_ref):
    h = h_ref[...].astype(jnp.float32)
    y = gg_ref[...] * (h * nx_ref[...]) + gb_ref[...] + h          # GRN apply
    z = jnp.dot(y.astype(jnp.bfloat16), w2_ref[...],
                preferred_element_type=jnp.float32) + b2_ref[...]  # pw2
    o_ref[...] = res_ref[...] + z                                  # residual


def _downsample_kernel(g_ref, w_ref, b_ref, o_ref):
    """stride-2 conv: 8 tap-major dots accumulated in f32."""
    t = g_ref.shape[1]
    cout = w_ref.shape[2]
    acc = jnp.zeros((t, cout), jnp.float32)
    for kk in range(8):
        acc = acc + jnp.dot(g_ref[kk], w_ref[kk], preferred_element_type=jnp.float32)
    o_ref[...] = acc + b_ref[...]


def _gate_kernel(a_ref, c_ref, w1a_ref, w1b_ref, b1_ref, w2_ref, b2_ref, o_ref):
    a = a_ref[...]
    c = c_ref[...]
    h = (jnp.dot(a.astype(jnp.bfloat16), w1a_ref[...], preferred_element_type=jnp.float32) +
         jnp.dot(c.astype(jnp.bfloat16), w1b_ref[...], preferred_element_type=jnp.float32) +
         b1_ref[...])
    h = _gelu(h)
    gt = 1.0 / (1.0 + jnp.exp(-(jnp.dot(h.astype(jnp.bfloat16), w2_ref[...],
                                        preferred_element_type=jnp.float32) + b2_ref[...])))
    o_ref[...] = gt * a + (1.0 - gt) * c


def fusion_gate_forward(fp, intra, inter):
    n, d = intra.shape
    t = _row_tile(n, 256)
    nt = _cdiv(n, t)
    return pl.pallas_call(
        _gate_kernel,
        grid=(nt,),
        in_specs=[pl.BlockSpec((t, d), lambda i: (i, 0)),
                  pl.BlockSpec((t, d), lambda i: (i, 0)),
                  pl.BlockSpec((d, d), lambda i: (0, 0)),
                  pl.BlockSpec((d, d), lambda i: (0, 0)),
                  pl.BlockSpec((1, d), lambda i: (0, 0)),
                  pl.BlockSpec((d, d), lambda i: (0, 0)),
                  pl.BlockSpec((1, d), lambda i: (0, 0))],
        out_specs=pl.BlockSpec((t, d), lambda i: (i, 0)),
        out_shape=jax.ShapeDtypeStruct((n, d), jnp.float32),
        compiler_params=_CP1,
    )(intra, inter, fp["w1a"], fp["w1b"], fp["b1"].reshape(1, d),
      fp["w2"], fp["b2"].reshape(1, d))


# ----------------------------------------------------------------------------
# host-side "coordinate manager" glue (numpy)
# ----------------------------------------------------------------------------
_OFF27 = np.array([(a, b, c) for a in (-1, 0, 1) for b in (-1, 0, 1) for c in (-1, 0, 1)],
                  np.int64)
_OFF8 = np.array([(a, b, c) for a in (0, 1) for b in (0, 1) for c in (0, 1)], np.int64)


def build_dw_map(coords, stride):
    lut = {tuple(c): i for i, c in enumerate(coords.tolist())}
    out = np.full((len(coords), 27), -1, np.int64)
    for i, c in enumerate(coords.tolist()):
        for k, o in enumerate(_OFF27):
            q = (c[0], c[1] + int(o[0]) * stride, c[2] + int(o[1]) * stride,
                 c[3] + int(o[2]) * stride)
            out[i, k] = lut.get(q, -1)
    return out


def build_down_map(coords, stride):
    s2 = stride * 2
    lut = {tuple(c): i for i, c in enumerate(coords.tolist())}
    out_lut, out_coords = {}, []
    for c in coords.tolist():
        q = (c[0], c[1] // s2 * s2, c[2] // s2 * s2, c[3] // s2 * s2)
        if q not in out_lut:
            out_lut[q] = len(out_coords)
            out_coords.append(q)
    gidx = np.full((len(out_coords), 8), -1, np.int64)
    for i, oc in enumerate(out_coords):
        for k, o in enumerate(_OFF8):
            q = (oc[0], oc[1] + int(o[0]) * stride, oc[2] + int(o[1]) * stride,
                 oc[3] + int(o[2]) * stride)
            gidx[i, k] = lut.get(q, -1)
    return np.array(out_coords, np.int64), gidx


def build_up_map(fine_coords, coarse_coords, stride):
    s2 = stride * 2
    lut = {tuple(c): i for i, c in enumerate(coarse_coords.tolist())}
    n = len(fine_coords)
    parent = np.zeros(n, np.int64)
    offk = np.zeros(n, np.int64)
    for i, c in enumerate(fine_coords.tolist()):
        p = (c[0], c[1] // s2 * s2, c[2] // s2 * s2, c[3] // s2 * s2)
        parent[i] = lut[p]
        offk[i] = (((c[1] - p[1]) // stride) * 4 + ((c[2] - p[2]) // stride) * 2 +
                   ((c[3] - p[3]) // stride))
    return parent, offk


def gather_neighbors(feats, idx_np):
    """feats[idx] with -1 -> zero row.  idx is tap-major [K, N] -> [K, N, C]."""
    n, c = feats.shape
    idx = jnp.asarray(np.where(idx_np < 0, n, idx_np).astype(np.int32))
    fp = jnp.concatenate([feats, jnp.zeros((1, c), feats.dtype)], axis=0)
    return fp[idx]


# ----------------------------------------------------------------------------
# parameters (bf16 matmul weights, pre-reshaped for the kernels)
# ----------------------------------------------------------------------------
class ParamGen:
    def __init__(self, seed=0):
        self.key = jax.random.PRNGKey(seed)

    def _next(self):
        self.key, k = jax.random.split(self.key)
        return k

    def normal(self, shape, std=0.02):
        return std * jax.random.normal(self._next(), shape, jnp.float32)

    def bf16(self, shape, std=0.02):
        return self.normal(shape, std).astype(jnp.bfloat16)

    def zeros(self, shape):
        return jnp.zeros(shape, jnp.float32)

    def ones(self, shape):
        return jnp.ones(shape, jnp.float32)

    def linear(self, din, dout):
        return {"w": self.bf16((din, dout)), "b": self.zeros((dout,))}


def make_block_params(pg, dim):
    return {
        "dw_w": pg.normal((27, dim)), "dw_b": pg.zeros((dim,)),
        "ln_g": pg.ones((dim,)), "ln_b": pg.zeros((dim,)),
        "pw1_w": pg.bf16((dim, 4 * dim)), "pw1_b": pg.zeros((4 * dim,)),
        "grn_g": pg.normal((4 * dim,)), "grn_b": pg.normal((4 * dim,)),
        "pw2_w": pg.bf16((4 * dim, dim)), "pw2_b": pg.zeros((dim,)),
    }


def make_transformer_params(pg, d, nhead, num_layers, num_dims):
    dh = d // nhead
    layers = []
    for _ in range(num_layers):
        layers.append({
            "wqkv_h": pg.bf16((3, nhead, d, dh)),
            "bqkv_h": pg.zeros((3, nhead, dh)),
            "wo_h": pg.bf16((nhead, dh, d)),
            "bo": pg.zeros((d,)),
            "ln1_g": pg.ones((d,)), "ln1_b": pg.zeros((d,)),
            "ln2_g": pg.ones((d,)), "ln2_b": pg.zeros((d,)),
            "ff1_w": pg.bf16((d, 4 * d)), "ff1_b": pg.zeros((4 * d,)),
            "ff2_w": pg.bf16((4 * d, d)), "ff2_b": pg.zeros((d,)),
        })
    return {"layers": layers, "relpos_w": pg.normal((num_dims, nhead)),
            "relpos_b": pg.zeros((nhead,)), "nhead": nhead, "d": d, "dh": dh}


def make_head_params(pg, dim, out_dim):
    return {"ln_g": pg.ones((dim,)), "ln_b": pg.zeros((dim,)),
            "block": make_block_params(pg, dim),
            "w": pg.normal((dim, out_dim))}


def make_params(pg, in_channels, glob_dim):
    enc_dims = [96, 192, 384, 768]
    enc_depths = [3, 3, 9, 3]
    dec_dims = [768, 384, 192, 96]
    d_mod, d_evt, K, num_modules = 768, 384, 2, 15
    p = {}
    p["stem_w"] = pg.normal((in_channels, enc_dims[0]))
    p["stem_norm"] = (pg.ones((96,)), pg.zeros((96,)))
    p["mask_voxel_emb"] = pg.zeros((96,))
    p["enc_blocks"] = [[make_block_params(pg, enc_dims[i]) for _ in range(enc_depths[i])]
                       for i in range(4)]
    p["downsample"] = [{"ln_g": pg.ones((enc_dims[i],)), "ln_b": pg.zeros((enc_dims[i],)),
                        "w": pg.bf16((8, enc_dims[i], enc_dims[i + 1])),
                        "b": pg.zeros((enc_dims[i + 1],))} for i in range(3)]
    p["mod_transformer"] = make_transformer_params(pg, d_mod, 12, 5, 3)
    p["pos_emb_mod"] = {"freq": pg.normal((3, 32), std=1.0), "proj": pg.linear(64, d_mod)}
    p["cls_mod"] = pg.zeros((1, 1, d_mod))
    p["cls_mod_extra_emb"] = pg.linear(2, d_mod)
    p["subtoken_proj"] = pg.linear(d_mod, K * d_evt)
    p["subtokens_to_module"] = pg.linear(K * d_evt, d_mod)
    p["pos_emb_sub"] = pg.normal((K, d_evt))
    p["global_feats_encoder"] = {"w1": pg.linear(glob_dim, d_evt),
                                 "w2": pg.linear(d_evt, d_evt)}
    p["event_transformer"] = make_transformer_params(pg, d_evt, 8, 5, 1)
    p["pos_emb"] = pg.normal((num_modules, d_evt))
    p["cls_evt"] = pg.zeros((1, 1, d_evt))
    p["fusion_gate"] = {"w1a": pg.bf16((d_mod, d_mod)), "w1b": pg.bf16((d_mod, d_mod)),
                        "b1": pg.zeros((d_mod,)),
                        "w2": pg.bf16((d_mod, d_mod)), "b2": pg.zeros((d_mod,))}
    p["upsample"] = [{"ln_g": pg.ones((dec_dims[i],)), "ln_b": pg.zeros((dec_dims[i],)),
                      "w": pg.bf16((dec_dims[i], 8 * dec_dims[i + 1])),
                      "b": pg.zeros((dec_dims[i + 1],))} for i in range(3)]
    p["dec_blocks"] = [[make_block_params(pg, dec_dims[i + 1]) for _ in range(2)]
                       for i in range(3)]
    p["primlepton"] = make_head_params(pg, 96, 1)
    p["seg"] = make_head_params(pg, 96, 3)
    p["charge"] = make_head_params(pg, 96, 1)
    p["iscc"] = pg.linear(d_evt, 1)
    return p


# ----------------------------------------------------------------------------
# model components
# ----------------------------------------------------------------------------
def block_forward(bp, feats, nbr_idx):
    """ConvNeXtV2 sparse Block: dwconv -> LN -> pw1 -> GELU -> GRN -> pw2 + res.

    Two tiled Pallas kernels; global GRN statistics computed with a tiny XLA
    reduce in between (from per-tile in-kernel partial sums)."""
    n, c = feats.shape
    c4 = 4 * c
    g = gather_neighbors(feats.astype(jnp.bfloat16), nbr_idx)       # [27,N,C] bf16

    t = _row_tile(n, 128)
    nt = _cdiv(n, t)
    h, ss = pl.pallas_call(
        functools.partial(_block_front_kernel, n_rows=n, tile=t, eps=1e-6),
        grid=(nt,),
        in_specs=[pl.BlockSpec((27, t, c), lambda i: (0, i, 0)),
                  pl.BlockSpec((27, c), lambda i: (0, 0)),
                  pl.BlockSpec((1, c), lambda i: (0, 0)),
                  pl.BlockSpec((1, c), lambda i: (0, 0)),
                  pl.BlockSpec((1, c), lambda i: (0, 0)),
                  pl.BlockSpec((c, c4), lambda i: (0, 0)),
                  pl.BlockSpec((1, c4), lambda i: (0, 0))],
        out_specs=[pl.BlockSpec((t, c4), lambda i: (i, 0)),
                   pl.BlockSpec((1, 8, c4), lambda i: (i, 0, 0))],
        out_shape=[jax.ShapeDtypeStruct((n, c4), jnp.bfloat16),
                   jax.ShapeDtypeStruct((nt, 8, c4), jnp.float32)],
        compiler_params=_CP1,
    )(g, bp["dw_w"], bp["dw_b"].reshape(1, c),
      bp["ln_g"].reshape(1, c), bp["ln_b"].reshape(1, c),
      bp["pw1_w"], bp["pw1_b"].reshape(1, c4))

    # GRN statistics: per-channel L2 norm over all voxels (MinkowskiGRN).
    # TODO(synk): reference GRN normalizes per sample of the sparse batch.
    sumsq = jnp.sum(ss[:, 0, :], axis=0)
    gx = jnp.sqrt(sumsq)
    nx = gx / (jnp.mean(gx) + 1e-6)

    t2 = _row_tile(n, 256)
    nt2 = _cdiv(n, t2)
    out = pl.pallas_call(
        _block_back_kernel,
        grid=(nt2,),
        in_specs=[pl.BlockSpec((t2, c4), lambda i: (i, 0)),
                  pl.BlockSpec((1, c4), lambda i: (0, 0)),
                  pl.BlockSpec((1, c4), lambda i: (0, 0)),
                  pl.BlockSpec((1, c4), lambda i: (0, 0)),
                  pl.BlockSpec((c4, c), lambda i: (0, 0)),
                  pl.BlockSpec((1, c), lambda i: (0, 0)),
                  pl.BlockSpec((t2, c), lambda i: (i, 0))],
        out_specs=pl.BlockSpec((t2, c), lambda i: (i, 0)),
        out_shape=jax.ShapeDtypeStruct((n, c), jnp.float32),
        compiler_params=_CP1,
    )(h, nx.reshape(1, c4), bp["grn_g"].reshape(1, c4), bp["grn_b"].reshape(1, c4),
      bp["pw2_w"], bp["pw2_b"].reshape(1, c), feats)
    return out


def downsample_forward(dp, feats, gather_idx):
    """LN -> stride-2 conv (8 tap-major accumulated dots, no im2col reshape)."""
    x = pallas_layernorm(feats, dp["ln_g"], dp["ln_b"], out_dtype=jnp.bfloat16)
    g = gather_neighbors(x, gather_idx)                              # [8,Nout,Cin] bf16
    n_out, cin = g.shape[1], g.shape[2]
    cout = dp["w"].shape[2]
    t = _row_tile(n_out, 256)
    nt = _cdiv(n_out, t)
    return pl.pallas_call(
        _downsample_kernel,
        grid=(nt,),
        in_specs=[pl.BlockSpec((8, t, cin), lambda i: (0, i, 0)),
                  pl.BlockSpec((8, cin, cout), lambda i: (0, 0, 0)),
                  pl.BlockSpec((1, cout), lambda i: (0, 0))],
        out_specs=pl.BlockSpec((t, cout), lambda i: (i, 0)),
        out_shape=jax.ShapeDtypeStruct((n_out, cout), jnp.float32),
        compiler_params=_CP1,
    )(g, dp["w"], dp["b"].reshape(1, cout))


def upsample_forward(up, feats_coarse, parent, offk):
    """MinkowskiConvolutionTranspose k=2,s=2 computed coarse-side (no 8x im2col);
    the [Cin, 8*Cout] weight layout is prebuilt at parameter time."""
    c_out = up["b"].shape[0]
    x = pallas_layernorm(feats_coarse, up["ln_g"], up["ln_b"])
    y = linear(x, up["w"], None).reshape(-1, 8, c_out)               # [Ncoarse,8,Cout]
    out = y[jnp.asarray(parent.astype(np.int32)), jnp.asarray(offk.astype(np.int32))]
    return out + up["b"][None, :]


def fourier_posemb(pp, coords):
    flat = coords.reshape(-1, coords.shape[-1])
    proj = jnp.dot(flat.astype(jnp.float32), pp["freq"])             # K=3 tiny -> XLA
    feat = jnp.concatenate([jnp.sin(2.0 * np.pi * proj), jnp.cos(2.0 * np.pi * proj)],
                           axis=-1)
    out = linear(feat, pp["proj"]["w"], pp["proj"]["b"])
    return out.reshape(coords.shape[:-1] + (out.shape[-1],))


def transformer_forward(tp, x, coords, key_padding_mask, num_special_tokens=1):
    """Post-norm encoder with learned relative-position bias (built in-kernel)."""
    B, S, d = x.shape
    nd = coords.shape[-1]
    Sp = _round_up(S, 128) if S > 64 else _round_up(S, 8)
    if Sp != S:
        x = jnp.concatenate([x, jnp.zeros((B, Sp - S, d), x.dtype)], axis=1)
        coords = jnp.concatenate([coords, jnp.zeros((B, Sp - S, nd), coords.dtype)], axis=1)
        key_padding_mask = jnp.concatenate(
            [key_padding_mask, jnp.ones((B, Sp - S), bool)], axis=1)

    # tiny [B,H,Sp] rel-pos projection, shared by all layers; the O(Sp^2) bias
    # matrix is regenerated inside the attention kernel (never hits HBM).
    cw = jnp.einsum("bsd,dh->bhs", coords.astype(jnp.float32),
                    tp["relpos_w"].astype(jnp.float32))
    cwq = (cw + tp["relpos_b"][None, :, None])[..., None]            # [B,H,Sp,1]
    cwk = cw[:, :, None, :]                                          # [B,H,1,Sp]
    pad_add = jnp.where(key_padding_mask, -1e9, 0.0).astype(jnp.float32)[:, None, :]

    xb = x.astype(jnp.float32)
    for lp in tp["layers"]:
        x1 = fused_attention_layer(xb, cwq, cwk, pad_add, lp, num_special_tokens)
        xf = pallas_ffn_block(x1.reshape(B * Sp, d),
                              lp["ff1_w"], lp["ff1_b"], lp["ff2_w"], lp["ff2_b"],
                              lp["ln2_g"], lp["ln2_b"])
        xb = xf.reshape(B, Sp, d)
    return xb[:, :S]


def head_forward(hp, feats, nbr_idx):
    x = pallas_layernorm(feats, hp["ln_g"], hp["ln_b"])
    x = block_forward(hp["block"], x, nbr_idx)
    # TODO(synk): concatenate the three heads' 1/3-wide projections lane-dense.
    return jnp.dot(x, hp["w"])


# ----------------------------------------------------------------------------
# full forward pass
# ----------------------------------------------------------------------------
def minkae_forward(p, coords0, feats0, x_glob, module_to_event, module_pos,
                   mask_bool=None, global_alpha=None):
    d_mod, d_evt, K = 768, 384, 2

    # --- coordinate manager glue (host, tap-major maps) -----------------------
    coords = [coords0]
    down_maps = []
    for l in range(3):
        oc, gidx = build_down_map(coords[l], 2 ** l)
        coords.append(oc)
        down_maps.append(np.ascontiguousarray(gidx.T))               # [8, Nout]
    dw_maps = [np.ascontiguousarray(build_dw_map(coords[l], 2 ** l).T)  # [27, N]
               for l in range(4)]

    # --- stem + masked-autoencoder replacement --------------------------------
    x = linear(feats0, p["stem_w"], None)                            # stem_conv (k=1)
    if mask_bool is not None:
        x = jnp.where(jnp.asarray(mask_bool)[:, None], p["mask_voxel_emb"][None, :], x)
    x = pallas_layernorm(x, p["stem_norm"][0], p["stem_norm"][1])    # stem_norm

    # --- encoder ---------------------------------------------------------------
    for i in range(4):
        for bp in p["enc_blocks"][i]:
            x = block_forward(bp, x, dw_maps[i])
        if i < 3:
            x = downsample_forward(p["downsample"][i], x, down_maps[i])

    feats3 = x                                   # [N3, 768]
    coords3 = coords[3]
    mod_ids = coords3[:, 0]
    M = int(mod_ids.max()) + 1
    assert M == module_to_event.shape[0]

    # --- group voxels by module (pad_sequence) ---------------------------------
    groups = [np.nonzero(mod_ids == m)[0] for m in range(M)]
    module_lengths = np.array([len(g) for g in groups], np.int64)
    L_vox = int(module_lengths.max())
    padded_idxs = np.full((M, L_vox), -1, np.int64)
    for m, g in enumerate(groups):
        padded_idxs[m, :len(g)] = g
    vmask = padded_idxs >= 0
    padded_feats = feats3[jnp.asarray(np.maximum(padded_idxs, 0))] * \
        jnp.asarray(vmask.astype(np.float32))[..., None]
    coords_xyz = coords3[:, 1:4].astype(np.float32)
    padded_coords = jnp.asarray(
        np.where(vmask[..., None], coords_xyz[np.maximum(padded_idxs, 0)], 0.0) / 48.0,
        jnp.float32)

    # --- module transformer inputs ---------------------------------------------
    module_hits, faser_cal = x_glob[0], x_glob[1]
    params_glob = x_glob[2:]
    m2e = jnp.asarray(module_to_event.astype(np.int32))
    mpos = jnp.asarray(module_pos.astype(np.int32))
    hits_per_module = module_hits[m2e, mpos]
    ergy_per_module = faser_cal[m2e, mpos]
    ergy_and_hits = jnp.stack([ergy_per_module, hits_per_module], axis=1)
    extra_emb = linear(ergy_and_hits, p["cls_mod_extra_emb"]["w"],
                       p["cls_mod_extra_emb"]["b"])[:, None, :]
    pos_emb_mod = fourier_posemb(p["pos_emb_mod"], padded_coords)
    cls_tokens_mod = jnp.broadcast_to(p["cls_mod"], (M, 1, d_mod)) + extra_emb
    mod_in = jnp.concatenate([cls_tokens_mod, padded_feats + pos_emb_mod], axis=1)

    key_pad = np.ones((M, 1 + L_vox), bool)
    key_pad[:, 0] = False
    key_pad[:, 1:] = np.arange(L_vox)[None, :] >= module_lengths[:, None]
    mod_coords = jnp.concatenate([jnp.zeros((M, 1, 3), jnp.float32), padded_coords], axis=1)

    module_seq_out = transformer_forward(p["mod_transformer"], mod_in, mod_coords,
                                         jnp.asarray(key_pad), num_special_tokens=1)

    # --- scatter intra-module context back to voxels ----------------------------
    vox_out = module_seq_out[:, 1:, :].reshape(-1, d_mod)
    idxs_flat = padded_idxs.reshape(-1)
    valid = idxs_flat >= 0
    intra_module_ctx = jnp.zeros_like(feats3).at[jnp.asarray(idxs_flat[valid])].set(
        vox_out[jnp.asarray(np.nonzero(valid)[0])])

    # --- sub-tokens and event transformer ---------------------------------------
    module_cls = module_seq_out[:, 0, :]
    subtoks = linear(module_cls, p["subtoken_proj"]["w"],
                     p["subtoken_proj"]["b"]).reshape(M, K, d_evt)
    subtoks = subtoks + p["pos_emb"][mpos][:, None, :] + p["pos_emb_sub"][None, :, :]
    flat_subtoks = subtoks.reshape(M * K, d_evt)
    flat_mod2evt = np.repeat(module_to_event, K)
    B = int(module_to_event.max()) + 1

    glob_cat = jnp.concatenate([g.reshape(g.shape[0], -1) for g in params_glob], axis=-1)
    gh = linear(glob_cat, p["global_feats_encoder"]["w1"]["w"],
                p["global_feats_encoder"]["w1"]["b"], act="gelu")
    glob_emb = linear(gh, p["global_feats_encoder"]["w2"]["w"],
                      p["global_feats_encoder"]["w2"]["b"])[:, None, :]
    cls_tokens_evt = jnp.broadcast_to(p["cls_evt"], (B, 1, d_evt))
    if global_alpha is not None:
        cls_tokens_evt = cls_tokens_evt + global_alpha * glob_emb

    egroups = [np.nonzero(flat_mod2evt == b)[0] for b in range(B)]
    elens = np.array([len(g) for g in egroups], np.int64)
    Lm = int(elens.max())
    egidx = np.full((B, Lm), -1, np.int64)
    for b, g in enumerate(egroups):
        egidx[b, :len(g)] = g
    emask = egidx >= 0
    padded_subs = flat_subtoks[jnp.asarray(np.maximum(egidx, 0))] * \
        jnp.asarray(emask.astype(np.float32))[..., None]
    evt_in = jnp.concatenate([cls_tokens_evt, padded_subs], axis=1)

    flat_mod_pos = np.repeat(module_pos, K).reshape(-1, 1).astype(np.float32)
    padded_pos = np.where(emask[..., None], flat_mod_pos[np.maximum(egidx, 0)], 0.0)
    evt_coords = jnp.asarray(
        np.concatenate([np.zeros((B, 1, 1), np.float32), padded_pos], axis=1), jnp.float32)
    e_key_pad = np.ones((B, 1 + Lm), bool)
    e_key_pad[:, 0] = False
    e_key_pad[:, 1:] = np.arange(Lm)[None, :] >= elens[:, None]

    event_seq_out = transformer_forward(p["event_transformer"], evt_in, evt_coords,
                                        jnp.asarray(e_key_pad), num_special_tokens=1)
    event_cls = event_seq_out[:, 0, :]
    mod_out = event_seq_out[:, 1:, :].reshape(-1, d_evt)
    ev_flat = egidx.reshape(-1)
    valid2 = ev_flat >= 0
    flat_ctx = jnp.zeros_like(flat_subtoks).at[jnp.asarray(ev_flat[valid2])].set(
        mod_out[jnp.asarray(np.nonzero(valid2)[0])])
    module_ctx = linear(flat_ctx.reshape(M, K * d_evt),
                        p["subtokens_to_module"]["w"], p["subtokens_to_module"]["b"])

    # --- fusion gate (fused kernel, no [N, 2d] concat) ---------------------------
    inter_module_ctx = module_ctx[jnp.asarray(mod_ids)]
    final_voxel_feat = fusion_gate_forward(p["fusion_gate"], intra_module_ctx,
                                           inter_module_ctx)

    # --- decoder ------------------------------------------------------------------
    feats = final_voxel_feat
    for i in range(3):
        fine = 2 - i
        parent, offk = build_up_map(coords[fine], coords[fine + 1], 2 ** fine)
        feats = upsample_forward(p["upsample"][i], feats, parent, offk)
        for bp in p["dec_blocks"][i]:
            feats = block_forward(bp, feats, dw_maps[fine])

    out_primlepton = head_forward(p["primlepton"], feats, dw_maps[0])
    out_seg = head_forward(p["seg"], feats, dw_maps[0])
    out_charge = head_forward(p["charge"], feats, dw_maps[0])
    out_iscc = linear(event_cls, p["iscc"]["w"], p["iscc"]["b"])

    return {"out_primlepton": out_primlepton, "out_seg": out_seg,
            "out_charge": out_charge, "out_iscc": out_iscc}


# ----------------------------------------------------------------------------
# example
# ----------------------------------------------------------------------------
if __name__ == "__main__":
    key = jax.random.PRNGKey(0)
    M, Bev = 4, 2
    in_channels = 2
    num_modules = 15                 # is_v5 == False path
    module_to_event = np.array([0, 0, 1, 1], np.int64)
    module_pos = np.array([0, 1, 0, 2], np.int64)

    # sparse voxel coordinates: per module ~24 unique points on a 16^3 grid
    coords_list = []
    kc = key
    for m in range(M):
        kc, sub = jax.random.split(kc)
        c = np.asarray(jax.random.randint(sub, (24, 3), 0, 16))
        c = np.unique(np.concatenate([c, np.zeros((1, 3), c.dtype)], axis=0), axis=0)
        coords_list.append(np.concatenate([np.full((len(c), 1), m, c.dtype), c], axis=1))
    coords0 = np.concatenate(coords_list, axis=0).astype(np.int64)
    N0 = coords0.shape[0]

    key, kf, kh, ke, kg1, kg2, km = jax.random.split(key, 7)
    feats0 = jax.random.normal(kf, (N0, in_channels), jnp.float32)
    module_hits = jax.random.normal(kh, (Bev, num_modules), jnp.float32)
    faser_cal = jax.random.normal(ke, (Bev, num_modules), jnp.float32)
    params_glob = [jax.random.normal(kg1, (Bev, 3), jnp.float32),
                   jax.random.normal(kg2, (Bev, 2), jnp.float32)]
    x_glob = [module_hits, faser_cal] + params_glob
    mask_bool = np.asarray(jax.random.bernoulli(km, 0.2, (N0,)))

    pg = ParamGen(0)
    params = make_params(pg, in_channels, glob_dim=5)

    out = minkae_forward(params, coords0, feats0, x_glob, module_to_event, module_pos,
                         mask_bool=mask_bool, global_alpha=0.5)
    jax.block_until_ready(out)
    print("KERNEL_OK")
</pallas_src>

<mosaic_0001>
module attributes {stable_mosaic.version = 11 : i64} {
  func.func @_ln_kernel(%arg0: i32, %arg1: memref<56x96xf32, #tpu.memory_space<vmem>>, %arg2: memref<1x96xf32, #tpu.memory_space<vmem>>, %arg3: memref<1x96xf32, #tpu.memory_space<vmem>>, %arg4: memref<56x96xf32, #tpu.memory_space<vmem>>) attributes {dimension_semantics = [#tpu.dimension_semantics<parallel>], iteration_bounds = array<i64: 2>, scalar_prefetch = 0 : i64, scratch_operands = 0 : i64, tpu.core_type = #tpu.core_type<tc>, window_params = [{transform_indices = @transform_0, window_bounds = array<i64: 56, 96>}, {pipeline_mode = #tpu.pipeline_mode<synchronous>, transform_indices = @transform_1, window_bounds = array<i64: 1, 96>}, {pipeline_mode = #tpu.pipeline_mode<synchronous>, transform_indices = @transform_2, window_bounds = array<i64: 1, 96>}, {transform_indices = @transform_3, window_bounds = array<i64: 56, 96>}]} {
    %c0 = arith.constant 0 : index
    %c0_0 = arith.constant 0 : index
    %0 = vector.load %arg1[%c0, %c0_0] : memref<56x96xf32, #tpu.memory_space<vmem>>, vector<56x96xf32>
    %cst = arith.constant dense<0.000000e+00> : vector<56xf32>
    %1 = vector.multi_reduction <add>, %0, %cst [1] : vector<56x96xf32> to vector<56xf32>
    %2 = vector.shape_cast %1 : vector<56xf32> to vector<56x1xf32>
    %cst_1 = arith.constant 9.600000e+01 : f32
    %3 = vector.broadcast %cst_1 : f32 to vector<56x1xf32>
    %4 = arith.divf %2, %3 : vector<56x1xf32>
    %5 = vector.broadcast %4 : vector<56x1xf32> to vector<56x96xf32>
    %6 = arith.subf %0, %5 : vector<56x96xf32>
    %7 = arith.mulf %6, %6 : vector<56x96xf32>
    %cst_2 = arith.constant dense<0.000000e+00> : vector<56xf32>
    %8 = vector.multi_reduction <add>, %7, %cst_2 [1] : vector<56x96xf32> to vector<56xf32>
    %9 = vector.shape_cast %8 : vector<56xf32> to vector<56x1xf32>
    %cst_3 = arith.constant 9.600000e+01 : f32
    %10 = vector.broadcast %cst_3 : f32 to vector<56x1xf32>
    %11 = arith.divf %9, %10 : vector<56x1xf32>
    %cst_4 = arith.constant 9.99999997E-7 : f32
    %12 = vector.broadcast %cst_4 : f32 to vector<56x1xf32>
    %13 = arith.addf %11, %12 : vector<56x1xf32>
    %14 = math.rsqrt %13 : vector<56x1xf32>
    %15 = vector.broadcast %14 : vector<56x1xf32> to vector<56x96xf32>
    %16 = arith.mulf %6, %15 : vector<56x96xf32>
    %c0_5 = arith.constant 0 : index
    %c0_6 = arith.constant 0 : index
    %17 = vector.load %arg2[%c0_5, %c0_6] : memref<1x96xf32, #tpu.memory_space<vmem>>, vector<1x96xf32>
    %18 = vector.broadcast %17 : vector<1x96xf32> to vector<56x96xf32>
    %19 = arith.mulf %16, %18 : vector<56x96xf32>
    %c0_7 = arith.constant 0 : index
    %c0_8 = arith.constant 0 : index
    %20 = vector.load %arg3[%c0_7, %c0_8] : memref<1x96xf32, #tpu.memory_space<vmem>>, vector<1x96xf32>
    %21 = vector.broadcast %20 : vector<1x96xf32> to vector<56x96xf32>
    %22 = arith.addf %19, %21 : vector<56x96xf32>
    %c0_9 = arith.constant 0 : index
    %c0_10 = arith.constant 0 : index
    %23 = vector.load %arg4[%c0_9, %c0_10] : memref<56x96xf32, #tpu.memory_space<vmem>>, vector<56x96xf32>
    tpu.vector_store %arg4[%c0_9, %c0_10], %22 {strides = array<i32>} : memref<56x96xf32, #tpu.memory_space<vmem>>, vector<56x96xf32>,
    return
  }
  func.func @transform_0(%arg0: i32) -> (i32, i32) {
    %c0_i32 = arith.constant 0 : i32
    %c0_i32_0 = arith.constant 0 : i32
    return %arg0, %c0_i32 : i32, i32
  }
  func.func @transform_1(%arg0: i32) -> (i32, i32) {
    %c0_i32 = arith.constant 0 : i32
    %c0_i32_0 = arith.constant 0 : i32
    %c0_i32_1 = arith.constant 0 : i32
    return %c0_i32, %c0_i32_0 : i32, i32
  }
  func.func @transform_2(%arg0: i32) -> (i32, i32) {
    %c0_i32 = arith.constant 0 : i32
    %c0_i32_0 = arith.constant 0 : i32
    %c0_i32_1 = arith.constant 0 : i32
    return %c0_i32, %c0_i32_0 : i32, i32
  }
  func.func @transform_3(%arg0: i32) -> (i32, i32) {
    %c0_i32 = arith.constant 0 : i32
    %c0_i32_0 = arith.constant 0 : i32
    return %arg0, %c0_i32 : i32, i32
  }
}

</mosaic_0001>

<llo_original>
// kernel: tpu_custom_call.1
$region0: #{tpu_custom_call.1}
  #allocation0 [shape = 'u32[]', space=smem, size = 0x4, offset = 0x4, fixed_abs, tag = 'smem constant byte address 0x4 - core index']
  #allocation1 [shape = 'u32[144,128]{1,0:T(1,128)}', space=vmem, size = 0x12000, scoped, tag = 'internal scratch']
  %s0 = inlined_call_operand.vmem [shape: f32[100,96], index: 0, kind: input, shape index: {}]
  %s1 = inlined_call_operand.vmem [shape: f32[1,96], index: 1, kind: input, shape index: {}]
  %s2 = inlined_call_operand.vmem [shape: f32[1,96], index: 2, kind: input, shape index: {}]
  %s3 = inlined_call_operand.vmem [shape: f32[100,96], index: 3, kind: output, shape index: {}]
  %s4 = sld [smem:[#allocation0]]
  $region93: #{tpu_custom_call.1} parent=0
    _
  %s6 = ssub.s32 1, %s4
  %s7 = scalar_select 0, %s6, %s4
  $region1: #{tpu_custom_call.1} parent=0
    #allocation2 [shape = 'u8[57344]{0}', space=vmem, size = 0xe000, scoped, tag = 'output window, operand 0']
    loop: start=0, step=1, limit=4
    $region2: #{tpu_custom_call.1} parent=1 // loop_pre_header
      _
    $region3: #{tpu_custom_call.1} parent=1 // loop_header
      %s9 = sphi 0, %s13
      %p10 = scmp.ge.s32.totalorder %s9, 4
      %s19 = sphi 0, %s21
      %s22 = sphi 0, %s19
      %s23 = sphi 0, %s22
      %s39 = sphi 0, %s23
      %s43 = sphi 0, %s43
      %s45 = sphi 0, %s43
      %s46 = sphi 0, %s45
      %s60 = sphi 0, %s46
      %s64 = sphi 0, %s64
      %s66 = sphi 0, %s64
      %s67 = sphi 0, %s66
      %s81 = sphi 0, %s67
      %s87 = sphi 0, %s89
      %s90 = sphi 0, %s87
      %s91 = sphi 0, %s90
      %s107 = sphi 0, %s91
    $region4: #{tpu_custom_call.1} parent=1 // loop_header_branch
      %12 = sbr.rel (%p10) target = $region8
    $region5: #{tpu_custom_call.1} parent=1 // loop_body
      %s14 = ssub.s32 %s9, 1
      %s15 = ssub.s32 %s9, 2
      %s16 = sadd.s32 %s9, 1
      %s17 = ssub.s32 %s9, %s16
      %p18 = scmp.eq.s32.totalorder %s17, 0
      %s20 = sadd.s32 %s19, 1
      %s21 = scalar_select %p18, %s19, %s20
      %p24 = pneg %p18
      %p25 = scmp.eq.s32.totalorder %s9, 1
      %p26 = por %p24, %p25
      %p27 = scmp.ne.s32.totalorder %s19, %s22
      %p28 = scmp.eq.s32.totalorder %s9, 0
      %p29 = por %p27, %p28
      %p30 = scmp.ne.s32.totalorder %s19, %s22
      %p31 = scmp.eq.s32.totalorder %s14, 1
      %p32 = por %p30, %p31
      %p33 = scmp.ne.s32.totalorder %s22, %s23
      %p34 = scmp.eq.s32.totalorder %s14, 0
      %p35 = por %p33, %p34
      %p36 = scmp.ne.s32.totalorder %s22, %s23
      %p37 = scmp.eq.s32.totalorder %s15, 1
      %p38 = por %p36, %p37
      %p40 = scmp.ne.s32.totalorder %s23, %s39
      %p41 = scmp.eq.s32.totalorder %s15, 0
      %p42 = por %p40, %p41
      %s44 = sadd.s32 %s43, 1
      %p47 = scmp.eq.s32.totalorder %s9, 1
      %p48 = scmp.ne.s32.totalorder %s43, %s45
      %p49 = scmp.eq.s32.totalorder %s9, 0
      %p50 = por %p48, %p49
      %p51 = scmp.ne.s32.totalorder %s43, %s45
      %p52 = scmp.eq.s32.totalorder %s14, 1
      %p53 = por %p51, %p52
      %p54 = scmp.ne.s32.totalorder %s45, %s46
      %p55 = scmp.eq.s32.totalorder %s14, 0
      %p56 = por %p54, %p55
      %p57 = scmp.ne.s32.totalorder %s45, %s46
      %p58 = scmp.eq.s32.totalorder %s15, 1
      %p59 = por %p57, %p58
      %p61 = scmp.ne.s32.totalorder %s46, %s60
      %p62 = scmp.eq.s32.totalorder %s15, 0
      %p63 = por %p61, %p62
      %s65 = sadd.s32 %s64, 1
      %p68 = scmp.eq.s32.totalorder %s9, 1
      %p69 = scmp.ne.s32.totalorder %s64, %s66
      %p70 = scmp.eq.s32.totalorder %s9, 0
      %p71 = por %p69, %p70
      %p72 = scmp.ne.s32.totalorder %s64, %s66
      %p73 = scmp.eq.s32.totalorder %s14, 1
      %p74 = por %p72, %p73
      %p75 = scmp.ne.s32.totalorder %s66, %s67
      %p76 = scmp.eq.s32.totalorder %s14, 0
      %p77 = por %p75, %p76
      %p78 = scmp.ne.s32.totalorder %s66, %s67
      %p79 = scmp.eq.s32.totalorder %s15, 1
      %p80 = por %p78, %p79
      %p82 = scmp.ne.s32.totalorder %s67, %s81
      %p83 = scmp.eq.s32.totalorder %s15, 0
      %p84 = por %p82, %p83
      %s85 = ssub.s32 %s9, %s16
      %p86 = scmp.eq.s32.totalorder %s85, 0
      %s88 = sadd.s32 %s87, 1
      %s89 = scalar_select %p86, %s87, %s88
      %p92 = pneg %p86
      %p93 = scmp.eq.s32.totalorder %s9, 1
      %p94 = por %p92, %p93
      %p95 = scmp.ne.s32.totalorder %s87, %s90
      %p96 = scmp.eq.s32.totalorder %s9, 0
      %p97 = por %p95, %p96
      %p98 = scmp.ne.s32.totalorder %s87, %s90
      %p99 = scmp.eq.s32.totalorder %s14, 1
      %p100 = por %p98, %p99
      %p101 = scmp.ne.s32.totalorder %s90, %s91
      %p102 = scmp.eq.s32.totalorder %s14, 0
      %p103 = por %p101, %p102
      %p104 = scmp.ne.s32.totalorder %s90, %s91
      %p105 = scmp.eq.s32.totalorder %s15, 1
      %p106 = por %p104, %p105
      %p108 = scmp.ne.s32.totalorder %s91, %s107
      %p109 = scmp.eq.s32.totalorder %s15, 0
      %p110 = por %p108, %p109
      %p111 = scmp.le.s32.totalorder 1, %s9
      %p112 = scmp.lt.s32.totalorder %s9, 3
      %p113 = pnand %p111, %p112
      %p114 = pneg %p113
      // Predicated region
      $region9: #{tpu_custom_call.1} parent=5 // pred_check
        _
      $region10: #{tpu_custom_call.1} parent=5 // pred_check_branch
        %116 = sbr.rel (%p113) target = $region12
      $region11: #{tpu_custom_call.1} parent=5 // pred_region
        %s117 = ssub.s32 %s9, 1
        // Predicated region
        $region13: #{tpu_custom_call.1} parent=11 // pred_check
          %p118 = pneg %p56
        $region14: #{tpu_custom_call.1} parent=11 // pred_check_branch
          %120 = sbr.rel (%p118) target = $region16
        $region15: #{tpu_custom_call.1} parent=11 // pred_region
          _
        $region16: #{tpu_custom_call.1} parent=11 // pred_fallthru
          _
        // Predicated region
        $region17: #{tpu_custom_call.1} parent=11 // pred_check
          %p121 = pneg %p77
        $region18: #{tpu_custom_call.1} parent=11 // pred_check_branch
          %123 = sbr.rel (%p121) target = $region20
        $region19: #{tpu_custom_call.1} parent=11 // pred_region
          _
        $region20: #{tpu_custom_call.1} parent=11 // pred_fallthru
          _
      $region12: #{tpu_custom_call.1} parent=5 // pred_fallthru
        _
      %p124 = scmp.lt.s32.totalorder %s9, 2
      // Predicated region
      $region21: #{tpu_custom_call.1} parent=5 // pred_check
        %p125 = pneg %p124
      $region22: #{tpu_custom_call.1} parent=5 // pred_check_branch
        %127 = sbr.rel (%p125) target = $region24
      $region23: #{tpu_custom_call.1} parent=5 // pred_region
        // Predicated region
        $region25: #{tpu_custom_call.1} parent=23 // pred_check
          %p128 = pneg %p29
        $region26: #{tpu_custom_call.1} parent=23 // pred_check_branch
          %130 = sbr.rel (%p128) target = $region28
        $region27: #{tpu_custom_call.1} parent=23 // pred_region
          %s131 = smul.u32 7, %s9
          %s132 = ssub.s32 13, %s131
          %p133 = scmp.lt.s32.totalorder %s132, 7
          %s134 = scalar_select %p133, %s132, 7
          %s135 = smul.u32 128, %s134
          %p136 = scmp.lt.s32.totalorder %s131, 12
          %s137 = scalar_select %p136, %s131, 12
          %s138 = smul.addr %s137, 8
          %s139 = scalar_lea.vmem %s0, %s138
          %s140 = smul.u32 7, %s9
          %s141 = ssub.s32 13, %s140
          %p142 = scmp.lt.s32.totalorder %s141, 7
          %s143 = scalar_select %p142, %s141, 7
          %s144 = smul.u32 128, %s143
        $region28: #{tpu_custom_call.1} parent=23 // pred_fallthru
          _
      $region24: #{tpu_custom_call.1} parent=5 // pred_fallthru
        _
      %p145 = scmp.le.s32.totalorder 1, %s9
      %p146 = scmp.lt.s32.totalorder %s9, 3
      %p147 = pnand %p145, %p146
      %p148 = pneg %p147
      // Predicated region
      $region29: #{tpu_custom_call.1} parent=5 // pred_check
        _
      $region30: #{tpu_custom_call.1} parent=5 // pred_check_branch
        %150 = sbr.rel (%p147) target = $region32
      $region31: #{tpu_custom_call.1} parent=5 // pred_region
        %s151 = ssub.s32 %s9, 1
        %s152 = smul.u32 7, %s14
        %s153 = ssub.s32 13, %s152
        %p154 = scmp.lt.s32.totalorder %s153, 7
        %s155 = scalar_select %p154, %s153, 7
        %s156 = smul.u32 128, %s155
        %p157 = scmp.lt.s32.totalorder %s152, 12
        %s158 = scalar_select %p157, %s152, 12
        %s159 = smul.addr %s158, 8
        %s160 = scalar_lea.vmem %s0, %s159
        %p161 = pneg %p35
        %p162 = pneg %p32
        %p163 = pneg %p56
        %p164 = pneg %p53
        %p165 = pneg %p77
        %p166 = pneg %p74
        %p167 = pneg %p103
        %p168 = pneg %p100
        %s169 = sand.u32 %s90, 1
        %s170 = sand.u32 %s90, 1
        %s171 = smul.addr %s170, 56
        %s172 = scalar_lea.vmem [#allocation2], %s171
        %s173 = smul.u32 7, %s14
        %s174 = ssub.s32 13, %s173
        %p175 = scmp.lt.s32.totalorder %s174, 7
        %s176 = scalar_select %p175, %s174, 7
        %s177 = smul.u32 128, %s176
        %p178 = scmp.lt.s32.totalorder %s173, 12
        %s179 = scalar_select %p178, %s173, 12
        %s180 = smul.addr %s179, 8
        %s181 = scalar_lea.vmem %s0, %s180
        %s182 = smul.u32 7, %s14
        %s183 = ssub.s32 13, %s182
        %p184 = scmp.lt.s32.totalorder %s183, 7
        %s185 = scalar_select %p184, %s183, 7
        %s186 = smul.u32 128, %s185
        %s187 = smul.u32 7, %s14
        %s188 = ssub.s32 13, %s187
        %p189 = scmp.lt.s32.totalorder %s188, 7
        %s190 = scalar_select %p189, %s188, 7
        %s191 = smul.u32 128, %s190
        %v192 = vld [vmem:[%s181] sm:$0xff]
        %v193 = vld [vmem:[%s181 + $0x8] sm:$0xff]
        %v194 = vld [vmem:[%s181 + $0x10] sm:$0xff]
        %v195 = vld [vmem:[%s181 + $0x18] sm:$0xff]
        %v196 = vld [vmem:[%s181 + $0x20] sm:$0xff]
        %v197 = vld [vmem:[%s181 + $0x28] sm:$0xff]
        %v198 = vld [vmem:[%s181 + $0x30] sm:$0xff]
        %vm199 = vcmask 785408
        %v200 = vsel %vm199, %v192, 0.0
        %201 = vadd.xlane.f32.xlu0 %v200
        %v202 = vpop.xlane.xlu0 %201
        %v203 = vsel %vm199, %v193, 0.0
        %204 = vadd.xlane.f32.xlu0 %v203
        %v205 = vpop.xlane.xlu0 %204
        %v206 = vsel %vm199, %v194, 0.0
        %207 = vadd.xlane.f32.xlu0 %v206
        %v208 = vpop.xlane.xlu0 %207
        %v209 = vsel %vm199, %v195, 0.0
        %210 = vadd.xlane.f32.xlu0 %v209
        %v211 = vpop.xlane.xlu0 %210
        %v212 = vsel %vm199, %v196, 0.0
        %213 = vadd.xlane.f32.xlu0 %v212
        %v214 = vpop.xlane.xlu0 %213
        %v215 = vsel %vm199, %v197, 0.0
        %216 = vadd.xlane.f32.xlu0 %v215
        %v217 = vpop.xlane.xlu0 %216
        %v218 = vsel %vm199, %v198, 0.0
        %219 = vadd.xlane.f32.xlu0 %v218
        %v220 = vpop.xlane.xlu0 %219
        %v221 = vrcp.pop 96.0
        %v222 = vmul.f32 %v202, %v221
        %v223 = vmul.f32 %v205, %v221
        %v224 = vmul.f32 %v208, %v221
        %v225 = vmul.f32 %v211, %v221
        %v226 = vmul.f32 %v214, %v221
        %v227 = vmul.f32 %v217, %v221
        %v228 = vmul.f32 %v220, %v221
        %v229 = vsub.f32 %v192, %v222
        %v230 = vsub.f32 %v193, %v223
        %v231 = vsub.f32 %v194, %v224
        %v232 = vsub.f32 %v195, %v225
        %v233 = vsub.f32 %v196, %v226
        %v234 = vsub.f32 %v197, %v227
        %v235 = vsub.f32 %v198, %v228
        %v236 = vmul.f32 %v229, %v229
        %v237 = vmul.f32 %v230, %v230
        %v238 = vmul.f32 %v231, %v231
        %v239 = vmul.f32 %v232, %v232
        %v240 = vmul.f32 %v233, %v233
        %v241 = vmul.f32 %v234, %v234
        %v242 = vmul.f32 %v235, %v235
        %v243 = vsel %vm199, %v236, 0.0
        %244 = vadd.xlane.f32.xlu0 %v243
        %v245 = vpop.xlane.xlu0 %244
        %v246 = vsel %vm199, %v237, 0.0
        %247 = vadd.xlane.f32.xlu0 %v246
        %v248 = vpop.xlane.xlu0 %247
        %v249 = vsel %vm199, %v238, 0.0
        %250 = vadd.xlane.f32.xlu0 %v249
        %v251 = vpop.xlane.xlu0 %250
        %v252 = vsel %vm199, %v239, 0.0
        %253 = vadd.xlane.f32.xlu0 %v252
        %v254 = vpop.xlane.xlu0 %253
        %v255 = vsel %vm199, %v240, 0.0
        %256 = vadd.xlane.f32.xlu0 %v255
        %v257 = vpop.xlane.xlu0 %256
        %v258 = vsel %vm199, %v241, 0.0
        %259 = vadd.xlane.f32.xlu0 %v258
        %v260 = vpop.xlane.xlu0 %259
        %v261 = vsel %vm199, %v242, 0.0
        %262 = vadd.xlane.f32.xlu0 %v261
        %v263 = vpop.xlane.xlu0 %262
        %v264 = vmul.f32 %v245, %v221
        %v265 = vmul.f32 %v248, %v221
        %v266 = vmul.f32 %v251, %v221
        %v267 = vmul.f32 %v254, %v221
        %v268 = vmul.f32 %v257, %v221
        %v269 = vmul.f32 %v260, %v221
        %v270 = vmul.f32 %v263, %v221
        %v271 = vadd.f32 %v264, 1e-06
        %v272 = vadd.f32 %v265, 1e-06
        %v273 = vadd.f32 %v266, 1e-06
        %v274 = vadd.f32 %v267, 1e-06
        %v275 = vadd.f32 %v268, 1e-06
        %v276 = vadd.f32 %v269, 1e-06
        %v277 = vadd.f32 %v270, 1e-06
        %v278 = vrsqrt.pop %v271
        %v279 = vrsqrt.pop %v272
        %v280 = vrsqrt.pop %v273
        %v281 = vrsqrt.pop %v274
        %v282 = vrsqrt.pop %v275
        %v283 = vrsqrt.pop %v276
        %v284 = vrsqrt.pop %v277
        %v285 = vmul.f32 %v229, %v278
        %v286 = vmul.f32 %v230, %v279
        %v287 = vmul.f32 %v231, %v280
        %v288 = vmul.f32 %v232, %v281
        %v289 = vmul.f32 %v233, %v282
        %v290 = vmul.f32 %v234, %v283
        %v291 = vmul.f32 %v235, %v284
        %v292 = vld [vmem:[%s1] sm:$0x1]
        %v294 = vlaneseq
        %v295 = vshrl.u32 %v294, 7
        %v296 = vsub.s32 0, %v295
        %v297 = vrot.slane %v292, %v296
        %v299 = vmul.f32 %v285, %v297
        %v300 = vmul.f32 %v286, %v297
        %v301 = vmul.f32 %v287, %v297
        %v302 = vmul.f32 %v288, %v297
        %v303 = vmul.f32 %v289, %v297
        %v304 = vmul.f32 %v290, %v297
        %v305 = vmul.f32 %v291, %v297
        %v306 = vld [vmem:[%s2] sm:$0x1]
        %v308 = vlaneseq
        %v309 = vshrl.u32 %v308, 7
        %v310 = vsub.s32 0, %v309
        %v311 = vrot.slane %v306, %v310
        %v313 = vadd.f32 %v299, %v311
        %v314 = vadd.f32 %v300, %v311
        %v315 = vadd.f32 %v301, %v311
        %v316 = vadd.f32 %v302, %v311
        %v317 = vadd.f32 %v303, %v311
        %v318 = vadd.f32 %v304, %v311
        %v319 = vadd.f32 %v305, %v311
        %320 = vst.msk [vmem:[%s172] sm:$0xff] %vm199, %v313
        %321 = vst.msk [vmem:[%s172 + $0x8] sm:$0xff] %vm199, %v314
        %322 = vst.msk [vmem:[%s172 + $0x10] sm:$0xff] %vm199, %v315
        %323 = vst.msk [vmem:[%s172 + $0x18] sm:$0xff] %vm199, %v316
        %324 = vst.msk [vmem:[%s172 + $0x20] sm:$0xff] %vm199, %v317
        %325 = vst.msk [vmem:[%s172 + $0x28] sm:$0xff] %vm199, %v318
        %326 = vst.msk [vmem:[%s172 + $0x30] sm:$0xff] %vm199, %v319
        %s327 = sand.u32 %s90, 1
        %s328 = sand.u32 %s90, 1
        %s329 = smul.addr %s328, 56
        %s330 = scalar_lea.vmem [#allocation2], %s329
        // Predicated region
        $region33: #{tpu_custom_call.1} parent=31 // pred_check
          %p331 = pneg %p100
        $region34: #{tpu_custom_call.1} parent=31 // pred_check_branch
          %333 = sbr.rel (%p331) target = $region36
        $region35: #{tpu_custom_call.1} parent=31 // pred_region
          %s334 = smul.u32 7, %s14
          %s335 = ssub.s32 13, %s334
          %p336 = scmp.lt.s32.totalorder %s335, 7
          %s337 = scalar_select %p336, %s335, 7
          %s338 = smul.u32 128, %s337
          %p339 = scmp.ne.s32.totalorder 0, %s338
          %s340 = smul.addr %s334, 8
          %s341 = scalar_lea.vmem %s3, %s340
          // Predicated region
          $region37: #{tpu_custom_call.1} parent=35 // pred_check
            %p342 = pneg %p339
          $region38: #{tpu_custom_call.1} parent=35 // pred_check_branch
            %344 = sbr.rel (%p342) target = $region40
          $region39: #{tpu_custom_call.1} parent=35 // pred_region
            // Predicated region
            $region41: #{tpu_custom_call.1} parent=39 // pred_check
              _
            $region42: #{tpu_custom_call.1} parent=39 // pred_check_branch
              %346 = sbr.rel (0) target = $region44
            $region43: #{tpu_custom_call.1} parent=39 // pred_region
              // Predicated region
              $region63: #{tpu_custom_call.1} parent=43 // pred_check
                _
              $region64: #{tpu_custom_call.1} parent=43 // pred_check_branch
                %409 = sbr.rel (0) target = $region66
              $region65: #{tpu_custom_call.1} parent=43 // pred_region
                %s410 = sdiv.u32.pop %s337, 7
                %s411 = srem.u32.pop %s337, 7
                // While loop
                $region67: #{tpu_custom_call.1} parent=65 // loop_pre_header
                  _
                $region68: #{tpu_custom_call.1} parent=65 // loop_header
                  %s413 = sphi 0, %s415
                  %p414 = scmp.ge.s32.totalorder %s413, %s410
                  %s418 = sphi 0, %s437
                  %s419 = sphi %s330, %s440
                  %s420 = sphi %s341, %s441
                $region69: #{tpu_custom_call.1} parent=65 // loop_header_branch
                  %417 = sbr.rel (%p414) target = $region73
                $region70: #{tpu_custom_call.1} parent=65 // loop_body
                  %v421 = vld [vmem:[%s419] sm:$0xff]
                  %422 = vst [vmem:[%s420] sm:$0xff] %v421
                  %v423 = vld [vmem:[%s419 + $0x8] sm:$0xff]
                  %424 = vst [vmem:[%s420 + $0x8] sm:$0xff] %v423
                  %v425 = vld [vmem:[%s419 + $0x10] sm:$0xff]
                  %426 = vst [vmem:[%s420 + $0x10] sm:$0xff] %v425
                  %v427 = vld [vmem:[%s419 + $0x18] sm:$0xff]
                  %428 = vst [vmem:[%s420 + $0x18] sm:$0xff] %v427
                  %v429 = vld [vmem:[%s419 + $0x20] sm:$0xff]
                  %430 = vst [vmem:[%s420 + $0x20] sm:$0xff] %v429
                  %v431 = vld [vmem:[%s419 + $0x28] sm:$0xff]
                  %432 = vst [vmem:[%s420 + $0x28] sm:$0xff] %v431
                  %v433 = vld [vmem:[%s419 + $0x30] sm:$0xff]
                  %434 = vst [vmem:[%s420 + $0x30] sm:$0xff] %v433
                  %s435 = sadd.s32 1, %s418
                  %p436 = scmp.ge.s32.totalorder %s435, %s410
                  %s437 = scalar_select %p436, 0, %s435
                  %s438 = smul.u32 %s437, 56
                  %s439 = smul.u32 %s437, 56
                  %s440 = scalar_lea.vmem %s330, %s438 [#allocation2]
                  %s441 = scalar_lea.vmem %s341, %s439
                $region71: #{tpu_custom_call.1} parent=65 // loop_footer
                  %s415 = sadd.s32 %s413, 1
                $region72: #{tpu_custom_call.1} parent=65 // loop_footer_branch
                  %412 = sbr.rel target = $region68
                $region73: #{tpu_custom_call.1} parent=65 // loop_exit
                  _
                %s442 = sdiv.u32.pop %s337, 7
                %s443 = srem.u32.pop %s337, 7
                %s444 = smul.u32 %s442, 7
                %s445 = smul.u32 8, %s444
                %s446 = scalar_lea.vmem %s330, %s445 [#allocation2]
                %s447 = smul.u32 8, %s444
                %s448 = scalar_lea.vmem %s341, %s447
                // While loop
                $region74: #{tpu_custom_call.1} parent=65 // loop_pre_header
                  _
                $region75: #{tpu_custom_call.1} parent=65 // loop_header
                  %s450 = sphi 0, %s452
                  %p451 = scmp.ge.s32.totalorder %s450, %s443
                  %s455 = sphi 0, %s462
                  %s456 = sphi %s446, %s465
                  %s457 = sphi %s448, %s466
                $region76: #{tpu_custom_call.1} parent=65 // loop_header_branch
                  %454 = sbr.rel (%p451) target = $region80
                $region77: #{tpu_custom_call.1} parent=65 // loop_body
                  %v458 = vld [vmem:[%s456] sm:$0xff]
                  %459 = vst [vmem:[%s457] sm:$0xff] %v458
                  %s460 = sadd.s32 1, %s455
                  %p461 = scmp.ge.s32.totalorder %s460, %s443
                  %s462 = scalar_select %p461, 0, %s460
                  %s463 = smul.u32 %s462, 8
                  %s464 = smul.u32 %s462, 8
                  %s465 = scalar_lea.vmem %s446, %s463 [#allocation2]
                  %s466 = scalar_lea.vmem %s448, %s464
                $region78: #{tpu_custom_call.1} parent=65 // loop_footer
                  %s452 = sadd.s32 %s450, 1
                $region79: #{tpu_custom_call.1} parent=65 // loop_footer_branch
                  %449 = sbr.rel target = $region75
                $region80: #{tpu_custom_call.1} parent=65 // loop_exit
                  _
              $region66: #{tpu_custom_call.1} parent=43 // pred_fallthru
                _
              // Predicated region
              $region81: #{tpu_custom_call.1} parent=43 // pred_check
                _
              $region82: #{tpu_custom_call.1} parent=43 // pred_check_branch
                %468 = sbr.rel target = $region84
              $region83: #{tpu_custom_call.1} parent=43 // pred_region
                _
              $region84: #{tpu_custom_call.1} parent=43 // pred_fallthru
                _
            $region44: #{tpu_custom_call.1} parent=39 // pred_fallthru
              _
            // Predicated region
            $region45: #{tpu_custom_call.1} parent=39 // pred_check
              _
            $region46: #{tpu_custom_call.1} parent=39 // pred_check_branch
              %348 = sbr.rel target = $region48
            $region47: #{tpu_custom_call.1} parent=39 // pred_region
              %s350 = ssub.s32 256, 1
              %s351 = sdiv.u32.pop %s337, 7
              %s352 = srem.u32.pop %s337, 7
              // While loop
              $region49: #{tpu_custom_call.1} parent=47 // loop_pre_header
                _
              $region50: #{tpu_custom_call.1} parent=47 // loop_header
                %s354 = sphi 0, %s356
                %p355 = scmp.ge.s32.totalorder %s354, %s351
                %s359 = sphi 0, %s378
                %s360 = sphi %s330, %s381
                %s361 = sphi %s341, %s382
              $region51: #{tpu_custom_call.1} parent=47 // loop_header_branch
                %358 = sbr.rel (%p355) target = $region55
              $region52: #{tpu_custom_call.1} parent=47 // loop_body
                %v362 = vld [vmem:[%s360] sm:%s350]
                %363 = vst [vmem:[%s361] sm:%s350] %v362
                %v364 = vld [vmem:[%s360 + $0x8] sm:%s350]
                %365 = vst [vmem:[%s361 + $0x8] sm:%s350] %v364
                %v366 = vld [vmem:[%s360 + $0x10] sm:%s350]
                %367 = vst [vmem:[%s361 + $0x10] sm:%s350] %v366
                %v368 = vld [vmem:[%s360 + $0x18] sm:%s350]
                %369 = vst [vmem:[%s361 + $0x18] sm:%s350] %v368
                %v370 = vld [vmem:[%s360 + $0x20] sm:%s350]
                %371 = vst [vmem:[%s361 + $0x20] sm:%s350] %v370
                %v372 = vld [vmem:[%s360 + $0x28] sm:%s350]
                %373 = vst [vmem:[%s361 + $0x28] sm:%s350] %v372
                %v374 = vld [vmem:[%s360 + $0x30] sm:%s350]
                %375 = vst [vmem:[%s361 + $0x30] sm:%s350] %v374
                %s376 = sadd.s32 1, %s359
                %p377 = scmp.ge.s32.totalorder %s376, %s351
                %s378 = scalar_select %p377, 0, %s376
                %s379 = smul.u32 %s378, 56
                %s380 = smul.u32 %s378, 56
                %s381 = scalar_lea.vmem %s330, %s379 [#allocation2]
                %s382 = scalar_lea.vmem %s341, %s380
              $region53: #{tpu_custom_call.1} parent=47 // loop_footer
                %s356 = sadd.s32 %s354, 1
              $region54: #{tpu_custom_call.1} parent=47 // loop_footer_branch
                %353 = sbr.rel target = $region50
              $region55: #{tpu_custom_call.1} parent=47 // loop_exit
                _
              %s383 = sdiv.u32.pop %s337, 7
              %s384 = srem.u32.pop %s337, 7
              %s385 = smul.u32 %s383, 7
              %s386 = smul.u32 8, %s385
              %s387 = scalar_lea.vmem %s330, %s386 [#allocation2]
              %s388 = smul.u32 8, %s385
              %s389 = scalar_lea.vmem %s341, %s388
              // While loop
              $region56: #{tpu_custom_call.1} parent=47 // loop_pre_header
                _
              $region57: #{tpu_custom_call.1} parent=47 // loop_header
                %s391 = sphi 0, %s393
                %p392 = scmp.ge.s32.totalorder %s391, %s384
                %s396 = sphi 0, %s403
                %s397 = sphi %s387, %s406
                %s398 = sphi %s389, %s407
              $region58: #{tpu_custom_call.1} parent=47 // loop_header_branch
                %395 = sbr.rel (%p392) target = $region62
              $region59: #{tpu_custom_call.1} parent=47 // loop_body
                %v399 = vld [vmem:[%s397] sm:%s350]
                %400 = vst [vmem:[%s398] sm:%s350] %v399
                %s401 = sadd.s32 1, %s396
                %p402 = scmp.ge.s32.totalorder %s401, %s384
                %s403 = scalar_select %p402, 0, %s401
                %s404 = smul.u32 %s403, 8
                %s405 = smul.u32 %s403, 8
                %s406 = scalar_lea.vmem %s387, %s404 [#allocation2]
                %s407 = scalar_lea.vmem %s389, %s405
              $region60: #{tpu_custom_call.1} parent=47 // loop_footer
                %s393 = sadd.s32 %s391, 1
              $region61: #{tpu_custom_call.1} parent=47 // loop_footer_branch
                %390 = sbr.rel target = $region57
              $region62: #{tpu_custom_call.1} parent=47 // loop_exit
                _
            $region48: #{tpu_custom_call.1} parent=39 // pred_fallthru
              _
          $region40: #{tpu_custom_call.1} parent=35 // pred_fallthru
            _
          %469 = vnop
        $region36: #{tpu_custom_call.1} parent=31 // pred_fallthru
          _
      $region32: #{tpu_custom_call.1} parent=5 // pred_fallthru
        _
      %p470 = scmp.le.s32.totalorder 2, %s9
      // Predicated region
      $region85: #{tpu_custom_call.1} parent=5 // pred_check
        %p471 = pneg %p470
      $region86: #{tpu_custom_call.1} parent=5 // pred_check_branch
        %473 = sbr.rel (%p471) target = $region88
      $region87: #{tpu_custom_call.1} parent=5 // pred_region
        %s474 = ssub.s32 %s9, 2
        // Predicated region
        $region89: #{tpu_custom_call.1} parent=87 // pred_check
          %p475 = pneg %p106
        $region90: #{tpu_custom_call.1} parent=87 // pred_check_branch
          %477 = sbr.rel (%p475) target = $region92
        $region91: #{tpu_custom_call.1} parent=87 // pred_region
          %s478 = sand.u32 %s91, 1
          %s479 = sand.u32 %s91, 1
          %s480 = smul.addr %s479, 56
          %s481 = scalar_lea.vmem [#allocation2], %s480
        $region92: #{tpu_custom_call.1} parent=87 // pred_fallthru
          _
      $region88: #{tpu_custom_call.1} parent=5 // pred_fallthru
        _
    $region6: #{tpu_custom_call.1} parent=1 // loop_footer
      %s13 = sadd.s32 1, %s9
    $region7: #{tpu_custom_call.1} parent=1 // loop_footer_branch
      %8 = sbr.rel target = $region3
    $region8: #{tpu_custom_call.1} parent=1 // loop_exit
      _

</llo_original>
